<compile_context>
chip_gen: v5e
topology: v5e:2x2
jax: 0.10.0
libtpu: 0.0.40
codegen_flags: <defaults>
</compile_context>

<pallas_src>
import jax
import jax.numpy as jnp
from jax.experimental import pallas as pl
from jax.experimental.pallas import tpu as pltpu

HIDDEN = 128      # hidden width of both heads (fixed by the module)
OUT_PAD = 128     # lane-dense padded width of the fused output (A + 1 <= 128)


def _actor_critic_kernel(x_ref, w1_ref, b1_ref, w2_ref, b2_ref, out_ref):
    # Fused layer 1 (policy + value): one (TB, F) @ (F, 256) MXU pass.
    # bf16 operands, f32 accumulation; bias + LeakyReLU stay in f32 (VPU).
    h = jnp.dot(x_ref[...].astype(jnp.bfloat16), w1_ref[...],
                preferred_element_type=jnp.float32) + b1_ref[...]
    h = jnp.where(h > 0, h, 0.01 * h)  # LeakyReLU, negative_slope=0.01

    # Fused layer 2: block-diagonal (256, 128) weight -> single lane-dense store.
    out = jnp.dot(h.astype(jnp.bfloat16), w2_ref[...],
                  preferred_element_type=jnp.float32) + b2_ref[...]
    out_ref[...] = out.astype(out_ref.dtype)


def custom_actor_critic_forward(x, packed, num_assets, *, block_b=512):
    """x: (B, features_dim) f32. packed: dict from pack_params (fused bf16 weights)."""
    B, F = x.shape
    H2 = packed["w1"].shape[1]     # 2 * HIDDEN
    OUT = packed["w2"].shape[1]    # OUT_PAD
    A = num_assets + 1

    args = (x, packed["w1"], packed["b1"], packed["w2"], packed["b2"])

    if B <= block_b:
        # Whole problem fits in VMEM: no grid, no pipeline bookkeeping.
        out = pl.pallas_call(
            _actor_critic_kernel,
            out_shape=jax.ShapeDtypeStruct((B, OUT), jnp.float32),
            in_specs=[pl.BlockSpec(memory_space=pltpu.MemorySpace.VMEM)] * 5,
            out_specs=pl.BlockSpec(memory_space=pltpu.MemorySpace.VMEM),
        )(*args)
    else:
        # Batch-tiled path: x / out tiles pipelined, weights stay resident.
        # block_b (multiple of 8) kept small enough that double-buffered tiles fit
        # comfortably even under v7x's smaller 64 MiB VMEM.
        TB = block_b
        n = pl.cdiv(B, TB)
        Bp = n * TB
        xp = jnp.pad(x, ((0, Bp - B), (0, 0))) if Bp != B else x
        out = pl.pallas_call(
            _actor_critic_kernel,
            out_shape=jax.ShapeDtypeStruct((Bp, OUT), jnp.float32),
            grid=(n,),
            in_specs=[
                pl.BlockSpec((TB, F), lambda i: (i, 0)),
                pl.BlockSpec((F, H2), lambda i: (0, 0)),
                pl.BlockSpec((1, H2), lambda i: (0, 0)),
                pl.BlockSpec((H2, OUT), lambda i: (0, 0)),
                pl.BlockSpec((1, OUT), lambda i: (0, 0)),
            ],
            out_specs=pl.BlockSpec((TB, OUT), lambda i: (i, 0)),
            compiler_params=pltpu.CompilerParams(
                dimension_semantics=("parallel",),
            ),
        )(xp, packed["w1"], packed["b1"], packed["w2"], packed["b2"])
        out = out[:B]

    act = out[:, :A]
    val = out[:, A:A + 1]
    return act, val


def init_params(key, features_dim, num_assets):
    """PyTorch-Linear-style init (uniform +/- 1/sqrt(fan_in)), weights pre-transposed
    to (in, out)."""
    ks = jax.random.split(key, 8)

    def lin(kw, kb, fan_in, fan_out):
        bound = 1.0 / jnp.sqrt(fan_in)
        w = jax.random.uniform(kw, (fan_in, fan_out), jnp.float32, -bound, bound)
        b = jax.random.uniform(kb, (1, fan_out), jnp.float32, -bound, bound)
        return w, b

    A = num_assets + 1
    w1p, b1p = lin(ks[0], ks[1], features_dim, HIDDEN)
    w2p, b2p = lin(ks[2], ks[3], HIDDEN, A)
    w1v, b1v = lin(ks[4], ks[5], features_dim, HIDDEN)
    w2v, b2v = lin(ks[6], ks[7], HIDDEN, 1)
    return dict(w1p=w1p, b1p=b1p, w2p=w2p, b2p=b2p,
                w1v=w1v, b1v=b1v, w2v=w2v, b2v=b2v)


def pack_params(p, num_assets):
    """Materialize the fused weights ONCE (not per call):
       w1 = [w1p | w1v]            : (F, 256)  bf16
       w2 = [[w2p, 0], [0, w2v]]   : (256, 128) bf16, lane-padded with zeros
    Biases are kept f32 (added after the f32-accumulated matmul)."""
    A = num_assets + 1
    H = HIDDEN
    w1 = jnp.concatenate([p["w1p"], p["w1v"]], axis=1)           # (F, 2H)
    b1 = jnp.concatenate([p["b1p"], p["b1v"]], axis=1)           # (1, 2H)
    w2 = jnp.zeros((2 * H, OUT_PAD), jnp.float32)
    w2 = w2.at[:H, :A].set(p["w2p"])
    w2 = w2.at[H:, A:A + 1].set(p["w2v"])
    b2 = jnp.zeros((1, OUT_PAD), jnp.float32)
    b2 = b2.at[:, :A].set(p["b2p"])
    b2 = b2.at[:, A:A + 1].set(p["b2v"])
    return dict(w1=w1.astype(jnp.bfloat16), b1=b1,
                w2=w2.astype(jnp.bfloat16), b2=b2)


def _reference_forward_f32(x, p):
    """Pure-JAX f32 reference matching the PyTorch module exactly."""
    lrelu = lambda t: jnp.where(t > 0, t, 0.01 * t)
    hp = lrelu(x @ p["w1p"] + p["b1p"])
    act = hp @ p["w2p"] + p["b2p"]
    hv = lrelu(x @ p["w1v"] + p["b1v"])
    val = hv @ p["w2v"] + p["b2v"]
    return act, val


def _reference_forward_packed(x, packed, A):
    """Pure-JAX reference of the fused/bf16 computation the kernel performs."""
    lrelu = lambda t: jnp.where(t > 0, t, 0.01 * t)
    h = lrelu(jnp.dot(x.astype(jnp.bfloat16), packed["w1"],
                      preferred_element_type=jnp.float32) + packed["b1"])
    out = jnp.dot(h.astype(jnp.bfloat16), packed["w2"],
                  preferred_element_type=jnp.float32) + packed["b2"]
    return out[:, :A], out[:, A:A + 1]


if __name__ == "__main__":
    key = jax.random.PRNGKey(0)
    k_x, k_p, k_x2 = jax.random.split(key, 3)

    batch = 2
    features_dim = 32
    num_assets = 7            # policy head -> num_assets + 1 = 8 outputs
    A = num_assets + 1

    x = jax.random.normal(k_x, (batch, features_dim), dtype=jnp.float32)
    params = init_params(k_p, features_dim, num_assets)
    packed = pack_params(params, num_assets)   # fused weights built once

    # --- small-batch (no-grid) path ---
    act, val = custom_actor_critic_forward(x, packed, num_assets)
    act = jax.block_until_ready(act)
    val = jax.block_until_ready(val)
    assert act.shape == (batch, A)
    assert val.shape == (batch, 1)

    # Tight check vs. the identical bf16-operand computation.
    act_p, val_p = _reference_forward_packed(x, packed, A)
    assert jnp.allclose(act, act_p, atol=1e-4, rtol=1e-4)
    assert jnp.allclose(val, val_p, atol=1e-4, rtol=1e-4)

    # Loose check vs. the full-f32 PyTorch-equivalent reference (bf16 operand error).
    act_f, val_f = _reference_forward_f32(x, params)
    assert jnp.allclose(act, act_f, atol=1e-1, rtol=1e-1)
    assert jnp.allclose(val, val_f, atol=1e-1, rtol=1e-1)

    # --- batch-tiled (grid) path ---
    xb = jax.random.normal(k_x2, (1030, features_dim), dtype=jnp.float32)
    act_b, val_b = custom_actor_critic_forward(xb, packed, num_assets, block_b=512)
    act_b = jax.block_until_ready(act_b)
    val_b = jax.block_until_ready(val_b)
    act_bp, val_bp = _reference_forward_packed(xb, packed, A)
    assert act_b.shape == (1030, A) and val_b.shape == (1030, 1)
    assert jnp.allclose(act_b, act_bp, atol=1e-4, rtol=1e-4)
    assert jnp.allclose(val_b, val_bp, atol=1e-4, rtol=1e-4)

    print("KERNEL_OK")
</pallas_src>

<mosaic_0001>
module attributes {stable_mosaic.version = 11 : i64} {
  func.func @_actor_critic_kernel(%arg0: memref<2x32xf32, #tpu.memory_space<vmem>>, %arg1: memref<32x256xbf16, #tpu.memory_space<vmem>>, %arg2: memref<1x256xf32, #tpu.memory_space<vmem>>, %arg3: memref<256x128xbf16, #tpu.memory_space<vmem>>, %arg4: memref<1x128xf32, #tpu.memory_space<vmem>>, %arg5: memref<2x128xf32, #tpu.memory_space<vmem>>) attributes {dimension_semantics = [], scalar_prefetch = 0 : i64, scratch_operands = 0 : i64, tpu.core_type = #tpu.core_type<tc>} {
    %c0 = arith.constant 0 : index
    %c0_0 = arith.constant 0 : index
    %0 = vector.load %arg0[%c0, %c0_0] : memref<2x32xf32, #tpu.memory_space<vmem>>, vector<2x32xf32>
    %1 = arith.truncf %0 : vector<2x32xf32> to vector<2x32xbf16>
    %c0_1 = arith.constant 0 : index
    %c0_2 = arith.constant 0 : index
    %2 = vector.load %arg1[%c0_1, %c0_2] : memref<32x256xbf16, #tpu.memory_space<vmem>>, vector<32x256xbf16>
    %cst = arith.constant dense<0.000000e+00> : vector<2x256xf32>
    %3 = tpu.matmul %1, %2, %cst {dimension_numbers = #tpu.dot_dimension_numbers<[1], [0], [0], [1], [0, 0, 1, 1], [], []>} : vector<2x32xbf16>, vector<32x256xbf16>, vector<2x256xf32> -> vector<2x256xf32>
    %c0_3 = arith.constant 0 : index
    %c0_4 = arith.constant 0 : index
    %4 = vector.load %arg2[%c0_3, %c0_4] : memref<1x256xf32, #tpu.memory_space<vmem>>, vector<1x256xf32>
    %5 = vector.broadcast %4 : vector<1x256xf32> to vector<2x256xf32>
    %6 = arith.addf %3, %5 : vector<2x256xf32>
    %cst_5 = arith.constant 0.000000e+00 : f32
    %7 = vector.broadcast %cst_5 : f32 to vector<2x256xf32>
    %8 = arith.cmpf ogt, %6, %7 : vector<2x256xf32>
    %cst_6 = arith.constant 0.00999999977 : f32
    %9 = vector.broadcast %cst_6 : f32 to vector<2x256xf32>
    %10 = arith.mulf %9, %6 : vector<2x256xf32>
    %11 = arith.select %8, %6, %10 : vector<2x256xi1>, vector<2x256xf32>
    %12 = arith.truncf %11 : vector<2x256xf32> to vector<2x256xbf16>
    %c0_7 = arith.constant 0 : index
    %c0_8 = arith.constant 0 : index
    %13 = vector.load %arg3[%c0_7, %c0_8] : memref<256x128xbf16, #tpu.memory_space<vmem>>, vector<256x128xbf16>
    %cst_9 = arith.constant dense<0.000000e+00> : vector<2x128xf32>
    %14 = tpu.matmul %12, %13, %cst_9 {dimension_numbers = #tpu.dot_dimension_numbers<[1], [0], [0], [1], [0, 0, 1, 1], [], []>} : vector<2x256xbf16>, vector<256x128xbf16>, vector<2x128xf32> -> vector<2x128xf32>
    %c0_10 = arith.constant 0 : index
    %c0_11 = arith.constant 0 : index
    %15 = vector.load %arg4[%c0_10, %c0_11] : memref<1x128xf32, #tpu.memory_space<vmem>>, vector<1x128xf32>
    %16 = vector.broadcast %15 : vector<1x128xf32> to vector<2x128xf32>
    %17 = arith.addf %14, %16 : vector<2x128xf32>
    %c0_12 = arith.constant 0 : index
    %c0_13 = arith.constant 0 : index
    %18 = vector.load %arg5[%c0_12, %c0_13] : memref<2x128xf32, #tpu.memory_space<vmem>>, vector<2x128xf32>
    tpu.vector_store %arg5[%c0_12, %c0_13], %17 {strides = array<i32>} : memref<2x128xf32, #tpu.memory_space<vmem>>, vector<2x128xf32>,
    return
  }
}

</mosaic_0001>

<llo_original>
// kernel: tpu_custom_call.1
$region0: #{tpu_custom_call.1}
  #allocation0 [shape = 'u32[]', space=smem, size = 0x4, offset = 0x4, fixed_abs, tag = 'smem constant byte address 0x4 - core index']
  #allocation1 [shape = 'u32[72,128]{1,0:T(1,128)}', space=vmem, size = 0x9000, scoped, tag = 'internal scratch']
  %s0 = inlined_call_operand.hbm [shape: f32[2,32], index: 0, kind: input, shape index: {}]
  %s1 = inlined_call_operand.hbm [shape: bf16[32,256], index: 1, kind: input, shape index: {}]
  %s2 = inlined_call_operand.hbm [shape: f32[1,256], index: 2, kind: input, shape index: {}]
  %s3 = inlined_call_operand.hbm [shape: bf16[256,128], index: 3, kind: input, shape index: {}]
  %s4 = inlined_call_operand.vmem [shape: f32[1,128], index: 4, kind: input, shape index: {}]
  %s5 = inlined_call_operand.hbm [shape: f32[2,128], index: 5, kind: output, shape index: {}]
  %s6 = sld [smem:[#allocation0]]
  $region46: #{tpu_custom_call.1} parent=0
    _
  %s8 = ssub.s32 1, %s6
  %s9 = scalar_select 0, %s8, %s6
  $region1: #{tpu_custom_call.1} parent=0
    #allocation2 [shape = 'u8[1024]{0}', space=vmem, size = 0x400, scoped, tag = 'input window, operand 0, single buffered']
    #allocation3 [shape = 's32[1]{0}', space=sflag, size = 0x4, scoped, tag = 'scoped memory for tpu_custom_call.1']
    #allocation4 [shape = 's32[1]{0}', space=sflag, size = 0x4, scoped, tag = 'scoped memory for tpu_custom_call.1']
    #allocation5 [shape = 'u8[16384]{0}', space=vmem, size = 0x4000, scoped, tag = 'input window, operand 1, single buffered']
    #allocation6 [shape = 's32[1]{0}', space=sflag, size = 0x4, scoped, tag = 'scoped memory for tpu_custom_call.1']
    #allocation7 [shape = 'u8[1024]{0}', space=vmem, size = 0x400, scoped, tag = 'input window, operand 2, single buffered']
    #allocation8 [shape = 'u8[65536]{0}', space=vmem, size = 0x10000, scoped, tag = 'input window, operand 3, single buffered']
    #allocation9 [shape = 's32[1]{0}', space=sflag, size = 0x4, scoped, tag = 'scoped memory for tpu_custom_call.1']
    #allocation10 [shape = 'u8[1024]{0}', space=vmem, size = 0x400, scoped, tag = 'output window, operand 0, single buffered']
    %10 = vsyncpa [#allocation3], 0
    %11 = vsyncpa [#allocation6], 0
    %12 = vsyncpa [#allocation9], 0
    %13 = vsyncpa [#allocation4], 0
    // Predicated region
    $region2: #{tpu_custom_call.1} parent=1 // pred_check
      _
    $region3: #{tpu_custom_call.1} parent=1 // pred_check_branch
      %15 = sbr.rel (0) target = $region5
    $region4: #{tpu_custom_call.1} parent=1 // pred_region
      %17 = vsyncadd [#allocation3], 0
      %s19 = sshll.u32 %s0, 4
      %s20 = int_to_ptr.hbm [resolvable:$true] %s19
      %s21 = sshll.u32 [#allocation2], 4
      %s22 = int_to_ptr.vmem [resolvable:$true] %s21
      %24 = dma.hbm_to_vmem [thread:$0]  %s20, 32, %s22, [#allocation3]
    $region5: #{tpu_custom_call.1} parent=1 // pred_fallthru
      _
    // Predicated region
    $region6: #{tpu_custom_call.1} parent=1 // pred_check
      _
    $region7: #{tpu_custom_call.1} parent=1 // pred_check_branch
      %26 = sbr.rel (0) target = $region9
    $region8: #{tpu_custom_call.1} parent=1 // pred_region
      %28 = vsyncadd [#allocation6], 0
      %s29 = sshll.u32 %s1, 4
      %s30 = int_to_ptr.hbm [resolvable:$true] %s29
      %s31 = sshll.u32 [#allocation5], 4
      %s32 = int_to_ptr.vmem [resolvable:$true] %s31
      %37 = dma.hbm_to_vmem [thread:$0]  %s30, 512, %s32, [#allocation6], 128, 128, 8
    $region9: #{tpu_custom_call.1} parent=1 // pred_fallthru
      _
    // Predicated region
    $region10: #{tpu_custom_call.1} parent=1 // pred_check
      _
    $region11: #{tpu_custom_call.1} parent=1 // pred_check_branch
      %39 = sbr.rel (0) target = $region13
    $region12: #{tpu_custom_call.1} parent=1 // pred_region
      %41 = vsyncadd [#allocation6], 0
      %s43 = sshll.u32 %s2, 4
      %s44 = int_to_ptr.hbm [resolvable:$true] %s43
      %s45 = sshll.u32 [#allocation7], 4
      %s46 = int_to_ptr.vmem [resolvable:$true] %s45
      %48 = dma.hbm_to_vmem [thread:$0]  %s44, 32, %s46, [#allocation6]
    $region13: #{tpu_custom_call.1} parent=1 // pred_fallthru
      _
    // Predicated region
    $region14: #{tpu_custom_call.1} parent=1 // pred_check
      _
    $region15: #{tpu_custom_call.1} parent=1 // pred_check_branch
      %50 = sbr.rel (0) target = $region17
    $region16: #{tpu_custom_call.1} parent=1 // pred_region
      %52 = vsyncadd [#allocation9], 0
      %s53 = sshll.u32 %s3, 4
      %s54 = int_to_ptr.hbm [resolvable:$true] %s53
      %s55 = sshll.u32 [#allocation8], 4
      %s56 = int_to_ptr.vmem [resolvable:$true] %s55
      %61 = dma.hbm_to_vmem [thread:$0]  %s54, 2048, %s56, [#allocation9], 64, 64, 4
    $region17: #{tpu_custom_call.1} parent=1 // pred_fallthru
      _
    // Predicated region
    $region18: #{tpu_custom_call.1} parent=1 // pred_check
      _
    $region19: #{tpu_custom_call.1} parent=1 // pred_check_branch
      %63 = sbr.rel (0) target = $region21
    $region20: #{tpu_custom_call.1} parent=1 // pred_region
      _
    $region21: #{tpu_custom_call.1} parent=1 // pred_fallthru
      _
    // Predicated region
    $region22: #{tpu_custom_call.1} parent=1 // pred_check
      _
    $region23: #{tpu_custom_call.1} parent=1 // pred_check_branch
      %65 = sbr.rel (0) target = $region25
    $region24: #{tpu_custom_call.1} parent=1 // pred_region
      %67 = dma.done [#allocation3], 32
    $region25: #{tpu_custom_call.1} parent=1 // pred_fallthru
      _
    // Predicated region
    $region26: #{tpu_custom_call.1} parent=1 // pred_check
      _
    $region27: #{tpu_custom_call.1} parent=1 // pred_check_branch
      %69 = sbr.rel (0) target = $region29
    $region28: #{tpu_custom_call.1} parent=1 // pred_region
      %71 = dma.done [#allocation6], 512
    $region29: #{tpu_custom_call.1} parent=1 // pred_fallthru
      _
    // Predicated region
    $region30: #{tpu_custom_call.1} parent=1 // pred_check
      _
    $region31: #{tpu_custom_call.1} parent=1 // pred_check_branch
      %73 = sbr.rel (0) target = $region33
    $region32: #{tpu_custom_call.1} parent=1 // pred_region
      %75 = dma.done [#allocation6], 32
    $region33: #{tpu_custom_call.1} parent=1 // pred_fallthru
      _
    // Predicated region
    $region34: #{tpu_custom_call.1} parent=1 // pred_check
      _
    $region35: #{tpu_custom_call.1} parent=1 // pred_check_branch
      %77 = sbr.rel (0) target = $region37
    $region36: #{tpu_custom_call.1} parent=1 // pred_region
      %79 = dma.done [#allocation9], 2048
    $region37: #{tpu_custom_call.1} parent=1 // pred_fallthru
      _
    %v81 = vld [vmem:[#allocation2] sm:$0x3]
    %v82 = vpack.c.bf16 %v81, %v81
    %v83 = vld [vmem:[#allocation5] sm:$0xff]
    %v84 = vld [vmem:[#allocation5 + $0x8] sm:$0xff]
    %v85 = vld [vmem:[#allocation5 + $0x10] sm:$0xff]
    %v86 = vld [vmem:[#allocation5 + $0x18] sm:$0xff]
    %v87 = vld [vmem:[#allocation7] sm:$0x3]
    %v89 = vperm.slane %v87, 0
    %v90 = vperm.slane %v87, 1
    %v97 = vunpack.c.l.b16 %v83
    %v98 = vunpack.c.h.b16 %v83
    %v99 = vunpack.c.l.b16 %v84
    %v100 = vunpack.c.h.b16 %v84
    %v101 = vunpack.c.l.b16 %v85
    %v102 = vunpack.c.h.b16 %v85
    %v103 = vunpack.c.l.b16 %v86
    %v104 = vunpack.c.h.b16 %v86
    %v105 = vpack.c.b16 %v99, %v97
    %v106 = vpack.c.b16 %v100, %v98
    %v107 = vpack.c.b16 %v103, %v101
    %v108 = vpack.c.b16 %v104, %v102
    %vm113 = vcmask 261120
    %v115 = vsel %vm113, %v82, 0
    %117 = vmatpush.bf16.msra.mxu0 0
    %118 = vmatpush.bf16.msra.mxu0 0
    %119 = vmatpush.bf16.msra.mxu0 0
    %120 = vmatpush.bf16.msra.mxu0 0
    %121 = vmatpush.bf16.msra.mxu0 0
    %122 = vmatpush.bf16.msra.mxu0 0
    %123 = vmatpush.bf16.msra.mxu0 %v107
    %124 = vmatpush.bf16.msra.mxu0 %v105
    %125 = vmatmul.bf16.gmra.mxu0 %v115
    %v126 = vpop.f32.mrf.mxu0
    %v127 = vadd.f32 %v89, %v126
    %v128 = vpop.f32.mrf.mxu0
    %129 = vdwg.mxu0
    %130 = vmatpush.bf16.msra.mxu0 0
    %131 = vmatpush.bf16.msra.mxu0 0
    %132 = vmatpush.bf16.msra.mxu0 0
    %133 = vmatpush.bf16.msra.mxu0 0
    %134 = vmatpush.bf16.msra.mxu0 0
    %135 = vmatpush.bf16.msra.mxu0 0
    %136 = vmatpush.bf16.msra.mxu0 %v108
    %137 = vmatpush.bf16.msra.mxu0 %v106
    %138 = vmatmul.bf16.gmra.mxu0 %v115
    %v139 = vpop.f32.mrf.mxu0
    %v140 = vadd.f32 %v90, %v139
    %v141 = vpop.f32.mrf.mxu0
    %142 = vdwg.mxu0
    %vm143 = vcmp.gt.f32.partialorder %v127, 0.0
    %vm144 = vcmp.gt.f32.partialorder %v140, 0.0
    %v145 = vmul.f32 %v127, 0.01
    %v146 = vmul.f32 %v140, 0.01
    %v147 = vsel %vm143, %v127, %v145
    %v148 = vsel %vm144, %v140, %v146
    %v149 = vpack.c.bf16 %v147, %v147
    %v150 = vpack.c.bf16 %v148, %v148
    %v151 = vld [vmem:[#allocation8] sm:$0xf]
    %v152 = vld [vmem:[#allocation8 + $0x4] sm:$0xf]
    %v153 = vld [vmem:[#allocation8 + $0x8] sm:$0xf]
    %v154 = vld [vmem:[#allocation8 + $0xc] sm:$0xf]
    %v155 = vld [vmem:[#allocation8 + $0x10] sm:$0xf]
    %v156 = vld [vmem:[#allocation8 + $0x14] sm:$0xf]
    %v157 = vld [vmem:[#allocation8 + $0x18] sm:$0xf]
    %v158 = vld [vmem:[#allocation8 + $0x1c] sm:$0xf]
    %v159 = vld [vmem:[#allocation8 + $0x20] sm:$0xf]
    %v160 = vld [vmem:[#allocation8 + $0x24] sm:$0xf]
    %v161 = vld [vmem:[#allocation8 + $0x28] sm:$0xf]
    %v162 = vld [vmem:[#allocation8 + $0x2c] sm:$0xf]
    %v163 = vld [vmem:[#allocation8 + $0x30] sm:$0xf]
    %v164 = vld [vmem:[#allocation8 + $0x34] sm:$0xf]
    %v165 = vld [vmem:[#allocation8 + $0x38] sm:$0xf]
    %v166 = vld [vmem:[#allocation8 + $0x3c] sm:$0xf]
    %v167 = vld [vmem:[#allocation8 + $0x40] sm:$0xf]
    %v168 = vld [vmem:[#allocation8 + $0x44] sm:$0xf]
    %v169 = vld [vmem:[#allocation8 + $0x48] sm:$0xf]
    %v170 = vld [vmem:[#allocation8 + $0x4c] sm:$0xf]
    %v171 = vld [vmem:[#allocation8 + $0x50] sm:$0xf]
    %v172 = vld [vmem:[#allocation8 + $0x54] sm:$0xf]
    %v173 = vld [vmem:[#allocation8 + $0x58] sm:$0xf]
    %v174 = vld [vmem:[#allocation8 + $0x5c] sm:$0xf]
    %v175 = vld [vmem:[#allocation8 + $0x60] sm:$0xf]
    %v176 = vld [vmem:[#allocation8 + $0x64] sm:$0xf]
    %v177 = vld [vmem:[#allocation8 + $0x68] sm:$0xf]
    %v178 = vld [vmem:[#allocation8 + $0x6c] sm:$0xf]
    %v179 = vld [vmem:[#allocation8 + $0x70] sm:$0xf]
    %v180 = vld [vmem:[#allocation8 + $0x74] sm:$0xf]
    %v181 = vld [vmem:[#allocation8 + $0x78] sm:$0xf]
    %v182 = vld [vmem:[#allocation8 + $0x7c] sm:$0xf]
    %v183 = vld [vmem:[%s4] sm:$0x1]
    %v185 = vperm.slane %v183, 0
    %v219 = vunpack.c.l.b16 %v151
    %v220 = vunpack.c.l.b16 %v152
    %v221 = vunpack.c.l.b16 %v153
    %v222 = vunpack.c.l.b16 %v154
    %v223 = vunpack.c.l.b16 %v155
    %v224 = vunpack.c.l.b16 %v156
    %v225 = vunpack.c.l.b16 %v157
    %v226 = vunpack.c.l.b16 %v158
    %v227 = vunpack.c.l.b16 %v159
    %v228 = vunpack.c.l.b16 %v160
    %v229 = vunpack.c.l.b16 %v161
    %v230 = vunpack.c.l.b16 %v162
    %v231 = vunpack.c.l.b16 %v163
    %v232 = vunpack.c.l.b16 %v164
    %v233 = vunpack.c.l.b16 %v165
    %v234 = vunpack.c.l.b16 %v166
    %v235 = vunpack.c.l.b16 %v167
    %v236 = vunpack.c.l.b16 %v168
    %v237 = vunpack.c.l.b16 %v169
    %v238 = vunpack.c.l.b16 %v170
    %v239 = vunpack.c.l.b16 %v171
    %v240 = vunpack.c.l.b16 %v172
    %v241 = vunpack.c.l.b16 %v173
    %v242 = vunpack.c.l.b16 %v174
    %v243 = vunpack.c.l.b16 %v175
    %v244 = vunpack.c.l.b16 %v176
    %v245 = vunpack.c.l.b16 %v177
    %v246 = vunpack.c.l.b16 %v178
    %v247 = vunpack.c.l.b16 %v179
    %v248 = vunpack.c.l.b16 %v180
    %v249 = vunpack.c.l.b16 %v181
    %v250 = vunpack.c.l.b16 %v182
    %v251 = vpack.c.b16 %v220, %v219
    %v252 = vpack.c.b16 %v222, %v221
    %v253 = vpack.c.b16 %v224, %v223
    %v254 = vpack.c.b16 %v226, %v225
    %v255 = vpack.c.b16 %v228, %v227
    %v256 = vpack.c.b16 %v230, %v229
    %v257 = vpack.c.b16 %v232, %v231
    %v258 = vpack.c.b16 %v234, %v233
    %v259 = vpack.c.b16 %v236, %v235
    %v260 = vpack.c.b16 %v238, %v237
    %v261 = vpack.c.b16 %v240, %v239
    %v262 = vpack.c.b16 %v242, %v241
    %v263 = vpack.c.b16 %v244, %v243
    %v264 = vpack.c.b16 %v246, %v245
    %v265 = vpack.c.b16 %v248, %v247
    %v266 = vpack.c.b16 %v250, %v249
    %283 = vmatpush.bf16.msra.mxu0 %v258
    %284 = vmatpush.bf16.msra.mxu0 %v257
    %285 = vmatpush.bf16.msra.mxu0 %v256
    %286 = vmatpush.bf16.msra.mxu0 %v255
    %287 = vmatpush.bf16.msra.mxu0 %v254
    %288 = vmatpush.bf16.msra.mxu0 %v253
    %289 = vmatpush.bf16.msra.mxu0 %v252
    %290 = vmatpush.bf16.msra.mxu0 %v251
    %291 = vmatmul.bf16.gmra.mxu0 %v149
    %v292 = vpop.f32.mrf.mxu0
    %v293 = vadd.f32 %v185, %v292
    %v294 = vpop.f32.mrf.mxu0
    %295 = vdwg.mxu0
    %296 = vmatpush.bf16.msra.mxu0 %v266
    %297 = vmatpush.bf16.msra.mxu0 %v265
    %298 = vmatpush.bf16.msra.mxu0 %v264
    %299 = vmatpush.bf16.msra.mxu0 %v263
    %300 = vmatpush.bf16.msra.mxu0 %v262
    %301 = vmatpush.bf16.msra.mxu0 %v261
    %302 = vmatpush.bf16.msra.mxu0 %v260
    %303 = vmatpush.bf16.msra.mxu0 %v259
    %304 = vmatmul.bf16.gmra.mxu0 %v150
    %v305 = vpop.f32.mrf.mxu0
    %v306 = vadd.f32 %v293, %v305
    %v307 = vpop.f32.mrf.mxu0
    %308 = vdwg.mxu0
    %309 = vst [vmem:[#allocation10] sm:$0x3] %v306
    // Predicated region
    $region38: #{tpu_custom_call.1} parent=1 // pred_check
      _
    $region39: #{tpu_custom_call.1} parent=1 // pred_check_branch
      %311 = sbr.rel (0) target = $region41
    $region40: #{tpu_custom_call.1} parent=1 // pred_region
      %313 = vsyncadd [#allocation4], 0
      %s315 = sshll.u32 [#allocation10], 4
      %s316 = int_to_ptr.vmem [resolvable:$true] %s315
      %s317 = sshll.u32 %s5, 4
      %s318 = int_to_ptr.hbm [resolvable:$true] %s317
      %320 = dma.vmem_to_hbm [thread:$0]  %s316, 32, %s318, [#allocation4]
    $region41: #{tpu_custom_call.1} parent=1 // pred_fallthru
      _
    // Predicated region
    $region42: #{tpu_custom_call.1} parent=1 // pred_check
      _
    $region43: #{tpu_custom_call.1} parent=1 // pred_check_branch
      %322 = sbr.rel (0) target = $region45
    $region44: #{tpu_custom_call.1} parent=1 // pred_region
      %324 = dma.done [#allocation4], 32
    $region45: #{tpu_custom_call.1} parent=1 // pred_fallthru
      _
    %325 = vsyncpa [#allocation3], 1
    %326 = vsyncpa [#allocation6], 1
    %327 = vsyncpa [#allocation9], 1
    %328 = vsyncpa [#allocation4], 1

</llo_original>
